<compile_context>
chip_gen: v7x
topology: tpu7x:2x2x1
jax: 0.10.0
libtpu: 0.0.40
codegen_flags: <defaults>
</compile_context>

<pallas_src>
import functools

import jax
import jax.numpy as jnp
from jax.experimental import pallas as pl
from jax.experimental.pallas import tpu as pltpu

_LANE = 128
_MIB = 1024 * 1024


def _round_up(n, m):
    return ((n + m - 1) // m) * m


def _sublane_pack(dtype):
    """Minimum sublane tile for a dtype: f32 -> 8, bf16 -> 16, int8/fp8 -> 32."""
    return max(8, 32 // jnp.dtype(dtype).itemsize)


def _vmem_capacity_bytes():
    try:
        return int(pltpu.get_tpu_info().vmem_capacity_bytes)
    except Exception:
        return 64 * _MIB  # conservative: v7x per-TensorCore VMEM


def _pick_tm(batch, pack, *, max_waste=0.15):
    """Largest batch tile in {512,...,pack} with <= max_waste padded rows."""
    cands = [c for c in (512, 256, 128, 64, 32, 16, 8) if c >= pack] or [pack]
    for c in cands:
        bp = _round_up(max(batch, pack), c)
        if (bp - batch) / bp <= max_waste:
            return c
    return min(cands, key=lambda c: _round_up(max(batch, pack), c))


# --------------------------------------------------------------------------
# Fused whole-MLP kernel (weights resident in VMEM)
# --------------------------------------------------------------------------
def _fused_mlp_kernel(*refs, relu_flags, out_widths, act_dtype, has_scratch):
    """refs = (x, w0, b0, w1, b1, ..., o, [h_scratch]).

    y = relu?(x @ W0 + b0) -> ... -> (h @ W_last + b_last); intermediate
    activations stay resident in VMEM scratch between layers.
    """
    n_layers = len(relu_flags)
    o_ref = refs[1 + 2 * n_layers]
    h_ref = refs[2 + 2 * n_layers] if has_scratch else None

    h = refs[0][...]
    for i, relu in enumerate(relu_flags):
        w_ref = refs[1 + 2 * i]
        b_ref = refs[2 + 2 * i]
        # MXU matmul, f32 accumulation; operands in the weight dtype (bf16
        # weights feed the MXU at full rate on v6e/v7x, no-op for f32).
        y = jnp.dot(h.astype(w_ref.dtype), w_ref[...],
                    preferred_element_type=jnp.float32)
        y = y + b_ref[...].astype(jnp.float32)   # (1, po) broadcasts over rows
        if relu:
            y = jnp.maximum(y, 0.0)              # dropout == identity (eval)
        if i + 1 < n_layers:
            po = out_widths[i]
            # Store the activation in the compute dtype (halves VMEM traffic
            # and scratch size for bf16 params).
            h_ref[:, :po] = y.astype(act_dtype)
            h = h_ref[:, :po]
        else:
            o_ref[...] = y.astype(o_ref.dtype)


def _fused_footprint(tm, pdims, layers, x_dtype, out_dtype, act_dtype,
                     weight_bufs):
    wb = weight_bufs * sum(w.size * w.dtype.itemsize + b.size * b.dtype.itemsize
                           for w, b, _ in layers)
    xb = 2 * tm * pdims[0] * jnp.dtype(x_dtype).itemsize
    ob = 2 * tm * pdims[-1] * jnp.dtype(out_dtype).itemsize
    sb = (tm * max(pdims[1:-1]) * jnp.dtype(act_dtype).itemsize
          if len(pdims) > 2 else 0)
    return wb + xb + ob + sb


# --------------------------------------------------------------------------
# Fallback: per-layer tiled matmul (weights streamed tile-by-tile from HBM)
# --------------------------------------------------------------------------
def _linear_kernel(x_ref, w_ref, b_ref, o_ref, acc_ref, *, relu):
    @pl.when(pl.program_id(2) == 0)
    def _():
        acc_ref[...] = jnp.zeros_like(acc_ref)

    acc_ref[...] += jnp.dot(x_ref[...].astype(w_ref.dtype), w_ref[...],
                            preferred_element_type=jnp.float32)

    @pl.when(pl.program_id(2) == pl.num_programs(2) - 1)
    def _():
        y = acc_ref[...] + b_ref[...].astype(jnp.float32)
        if relu:
            y = jnp.maximum(y, 0.0)
        o_ref[...] = y.astype(o_ref.dtype)


def _largest_tile(dim, cap):
    for t in range(cap, 0, -_LANE):     # multiples of 128, descending
        if dim % t == 0:
            return t
    return dim


def _tiled_linear(xp, w, b, relu, out_dtype, tm):
    M, K = xp.shape
    N = w.shape[1]
    tn = _largest_tile(N, 512)
    tk = _largest_tile(K, 512)
    grid = (M // tm, N // tn, K // tk)
    return pl.pallas_call(
        functools.partial(_linear_kernel, relu=relu),
        out_shape=jax.ShapeDtypeStruct((M, N), out_dtype),
        grid=grid,
        in_specs=[pl.BlockSpec((tm, tk), lambda i, j, k: (i, k)),
                  pl.BlockSpec((tk, tn), lambda i, j, k: (k, j)),
                  pl.BlockSpec((1, tn), lambda i, j, k: (0, j))],
        out_specs=pl.BlockSpec((tm, tn), lambda i, j, k: (i, j)),
        scratch_shapes=[pltpu.VMEM((tm, tn), jnp.float32)],
        compiler_params=pltpu.CompilerParams(
            dimension_semantics=("parallel", "parallel", "arbitrary")),
    )(xp, w, b)


def _layerwise_mlp(x, layers, n_out):
    """Used when resident weights exceed the VMEM budget (e.g. v7x 64 MiB)."""
    B, n_in = x.shape
    out_dtype = x.dtype
    pack = max([_sublane_pack(x.dtype)]
               + [_sublane_pack(w.dtype) for w, _, _ in layers])
    tm = _pick_tm(B, pack)
    Bp = _round_up(max(B, pack), tm)
    pin = layers[0][0].shape[0]
    h = (x if (Bp, pin) == x.shape
         else jnp.zeros((Bp, pin), x.dtype).at[:B, :n_in].set(x))
    for li, (w, b, relu) in enumerate(layers):
        last = li == len(layers) - 1
        h = _tiled_linear(h, w, b, relu, out_dtype if last else w.dtype, tm)
    return h[:B, :n_out]


# --------------------------------------------------------------------------
# Driver
# --------------------------------------------------------------------------
def fused_mlp(x, layers, n_out):
    """x: (B, n_in) unpadded.  layers: [(w (pi, po), b (1, po), relu)], with
    feature dims already zero-padded to multiples of 128 (pack_mlp_params)."""
    B, n_in = x.shape
    out_dtype = x.dtype
    act_dtype = layers[0][0].dtype

    pdims = [_round_up(n_in, _LANE)] + [w.shape[1] for w, _, _ in layers]
    for li, (w, b, _) in enumerate(layers):
        assert w.shape[0] == pdims[li] and w.shape[1] % _LANE == 0
        assert b.shape == (1, w.shape[1])

    n_layers = len(layers)
    relu_flags = tuple(r for _, _, r in layers)
    has_scratch = n_layers > 1

    pack = max(_sublane_pack(x.dtype), _sublane_pack(out_dtype),
               _sublane_pack(act_dtype))
    tm = _pick_tm(B, pack)

    vmem_cap = _vmem_capacity_bytes()
    budget = int(0.85 * vmem_cap)

    # Shrink the batch tile (never the weights) until the resident footprint
    # fits; weights are single-buffered since their block index never changes.
    while tm > pack and _fused_footprint(tm, pdims, layers, x.dtype, out_dtype,
                                         act_dtype, 1) > budget:
        tm //= 2
    if _fused_footprint(tm, pdims, layers, x.dtype, out_dtype,
                        act_dtype, 1) > budget:
        # Weights alone cannot stay resident -> stream them tile-by-tile.
        return _layerwise_mlp(x, layers, n_out)

    Bp = _round_up(max(B, pack), tm)
    # Give both TensorCores work when the batch collapses to a single tile
    # (v7x megacore; ~0.35 us extra grid step on single-TC chips -> harmless).
    if Bp // tm == 1 and tm // 2 >= pack:
        tm //= 2
    n_grid = Bp // tm

    xp = (x if (Bp, pdims[0]) == x.shape
          else jnp.zeros((Bp, pdims[0]), x.dtype).at[:B, :n_in].set(x))
    inputs = [xp]
    for w, b, _ in layers:
        inputs.extend([w, b])

    flops = 2 * Bp * sum(pdims[i] * pdims[i + 1] for i in range(n_layers))
    bytes_accessed = (
        xp.size * xp.dtype.itemsize
        + sum(w.size * w.dtype.itemsize + b.size * b.dtype.itemsize
              for w, b, _ in layers)
        + Bp * pdims[-1] * jnp.dtype(out_dtype).itemsize)

    kernel = functools.partial(
        _fused_mlp_kernel, relu_flags=relu_flags, out_widths=tuple(pdims[1:]),
        act_dtype=act_dtype, has_scratch=has_scratch)

    def make_call(single_buffer_weights):
        wkw = ({"pipeline_mode": pl.Buffered(1)}
               if single_buffer_weights else {})
        in_specs = [pl.BlockSpec((tm, pdims[0]), lambda i: (i, 0))]
        for li in range(n_layers):
            pi, po = pdims[li], pdims[li + 1]
            in_specs.append(pl.BlockSpec((pi, po), lambda i: (0, 0), **wkw))
            in_specs.append(pl.BlockSpec((1, po), lambda i: (0, 0), **wkw))
        scratch = ([pltpu.VMEM((tm, max(pdims[1:-1])), act_dtype)]
                   if has_scratch else [])
        wbufs = 1 if single_buffer_weights else 2
        footprint = _fused_footprint(tm, pdims, layers, x.dtype, out_dtype,
                                     act_dtype, wbufs)
        vmem_limit = min(vmem_cap,
                         max(int(footprint * 1.3) + 4 * _MIB, 32 * _MIB))
        return pl.pallas_call(
            kernel,
            out_shape=jax.ShapeDtypeStruct((Bp, pdims[-1]), out_dtype),
            grid=(n_grid,),
            in_specs=in_specs,
            out_specs=pl.BlockSpec((tm, pdims[-1]), lambda i: (i, 0)),
            scratch_shapes=scratch,
            compiler_params=pltpu.CompilerParams(
                dimension_semantics=("parallel",),
                vmem_limit_bytes=int(vmem_limit)),
            cost_estimate=pl.CostEstimate(flops=flops, transcendentals=0,
                                          bytes_accessed=bytes_accessed),
        )

    try:
        yp = make_call(True)(*inputs)        # single-buffered weights
    except Exception:
        yp = make_call(False)(*inputs)       # fallback: double-buffered weights

    return yp[:B, :n_out]                    # slice padding off -> exact shape


# --------------------------------------------------------------------------
# Parameters (torch.nn.Linear-style init) + one-time packing
# --------------------------------------------------------------------------
def init_linear_params(key, n_in, n_out, dtype=jnp.float32):
    """U(-1/sqrt(fan_in), 1/sqrt(fan_in)); weight stored transposed (in, out)."""
    kw, kb = jax.random.split(key)
    bound = 1.0 / (n_in ** 0.5)
    w_t = jax.random.uniform(kw, (n_in, n_out), dtype, -bound, bound)
    b = jax.random.uniform(kb, (1, n_out), dtype, -bound, bound)
    return w_t, b


def init_mlp_params(key, n_inputs, n_outputs, hparams, dtype=jnp.float32):
    depth = hparams["mlp_depth"]
    width = hparams["mlp_width"]
    keys = jax.random.split(key, max(depth, 1))
    params = {}
    if depth > 1:
        params["input"] = init_linear_params(keys[0], n_inputs, width, dtype)
        params["hiddens"] = [
            init_linear_params(keys[1 + i], width, width, dtype)
            for i in range(depth - 2)]
        params["output"] = init_linear_params(keys[depth - 1], width,
                                              n_outputs, dtype)
    else:
        params["input"] = init_linear_params(keys[0], n_inputs, n_outputs,
                                             dtype)
    return params


def pack_mlp_params(params, hparams):
    """One-time conversion to the kernel layout: (in, out) weights, both
    feature dims zero-padded to multiples of 128.  Done once (not per forward
    call), so weight HBM traffic is not duplicated at inference time."""
    depth = hparams["mlp_depth"]
    if depth > 1:
        raw = ([(params["input"], True)]
               + [(hp, True) for hp in params["hiddens"]]
               + [(params["output"], False)])
    else:
        raw = [(params["input"], False)]
    layers = []
    for (w, b), relu in raw:
        di, do = w.shape
        pi, po = _round_up(di, _LANE), _round_up(do, _LANE)
        if (pi, po) != (di, do):
            w = jnp.zeros((pi, po), w.dtype).at[:di, :do].set(w)
            b = jnp.zeros((1, po), b.dtype).at[:, :do].set(b)
        layers.append((w, b, relu))
    n_out = raw[-1][0][0].shape[1]
    return layers, n_out


def mlp_forward(packed_layers, n_out, x):
    """Matches MLP.forward (eval mode): input -> [dropout -> ReLU -> hidden]*
    -> output, with dropout as identity."""
    return fused_mlp(x, packed_layers, n_out)


if __name__ == "__main__":
    hparams = {"mlp_depth": 3, "mlp_width": 32, "mlp_dropout": 0.0}
    n_inputs, n_outputs, batch = 16, 8, 8

    key = jax.random.PRNGKey(0)
    k_params, k_x = jax.random.split(key)

    params = init_mlp_params(k_params, n_inputs, n_outputs, hparams)
    layers, n_out = pack_mlp_params(params, hparams)     # pad weights ONCE
    x = jax.random.normal(k_x, (batch, n_inputs), jnp.float32)

    y = mlp_forward(layers, n_out, x)
    jax.block_until_ready(y)

    # Pure-JAX reference (unpadded math, eval-mode dropout == identity).
    def ref_forward(params, x):
        w_t, b = params["input"]
        h = jnp.maximum(x @ w_t + b, 0.0)
        for hw_t, hb in params["hiddens"]:
            h = jnp.maximum(h @ hw_t + hb, 0.0)
        ow_t, ob = params["output"]
        return h @ ow_t + ob

    y_ref = ref_forward(params, x)
    assert y.shape == (batch, n_outputs)
    assert jnp.allclose(y, y_ref, atol=1e-4, rtol=1e-4)

    print("KERNEL_OK")
</pallas_src>

<mosaic_0001>
module attributes {stable_mosaic.version = 11 : i64} {
  func.func @_fused_mlp_kernel(%arg0: i32, %arg1: memref<8x128xf32, #tpu.memory_space<vmem>>, %arg2: memref<128x128xf32, #tpu.memory_space<vmem>>, %arg3: memref<1x128xf32, #tpu.memory_space<vmem>>, %arg4: memref<128x128xf32, #tpu.memory_space<vmem>>, %arg5: memref<1x128xf32, #tpu.memory_space<vmem>>, %arg6: memref<128x128xf32, #tpu.memory_space<vmem>>, %arg7: memref<1x128xf32, #tpu.memory_space<vmem>>, %arg8: memref<8x128xf32, #tpu.memory_space<vmem>>, %arg9: memref<8x128xf32, #tpu.memory_space<vmem>>) attributes {dimension_semantics = [#tpu.dimension_semantics<parallel>], iteration_bounds = array<i64: 1>, scalar_prefetch = 0 : i64, scratch_operands = 1 : i64, tpu.core_type = #tpu.core_type<tc>, window_params = [{transform_indices = @transform_0, window_bounds = array<i64: 8, 128>}, {pipeline_mode = #tpu.pipeline_mode<synchronous>, transform_indices = @transform_1, window_bounds = array<i64: 128, 128>}, {pipeline_mode = #tpu.pipeline_mode<synchronous>, transform_indices = @transform_2, window_bounds = array<i64: 1, 128>}, {pipeline_mode = #tpu.pipeline_mode<synchronous>, transform_indices = @transform_3, window_bounds = array<i64: 128, 128>}, {pipeline_mode = #tpu.pipeline_mode<synchronous>, transform_indices = @transform_4, window_bounds = array<i64: 1, 128>}, {pipeline_mode = #tpu.pipeline_mode<synchronous>, transform_indices = @transform_5, window_bounds = array<i64: 128, 128>}, {pipeline_mode = #tpu.pipeline_mode<synchronous>, transform_indices = @transform_6, window_bounds = array<i64: 1, 128>}, {transform_indices = @transform_7, window_bounds = array<i64: 8, 128>}]} {
    %c0 = arith.constant 0 : index
    %c0_0 = arith.constant 0 : index
    %0 = vector.load %arg1[%c0, %c0_0] : memref<8x128xf32, #tpu.memory_space<vmem>>, vector<8x128xf32>
    %c0_1 = arith.constant 0 : index
    %c0_2 = arith.constant 0 : index
    %1 = vector.load %arg2[%c0_1, %c0_2] : memref<128x128xf32, #tpu.memory_space<vmem>>, vector<128x128xf32>
    %cst = arith.constant dense<0.000000e+00> : vector<8x128xf32>
    %2 = tpu.matmul %0, %1, %cst {dimension_numbers = #tpu.dot_dimension_numbers<[1], [0], [0], [1], [0, 0, 1, 1], [], []>} : vector<8x128xf32>, vector<128x128xf32>, vector<8x128xf32> -> vector<8x128xf32>
    %c0_3 = arith.constant 0 : index
    %c0_4 = arith.constant 0 : index
    %3 = vector.load %arg3[%c0_3, %c0_4] : memref<1x128xf32, #tpu.memory_space<vmem>>, vector<1x128xf32>
    %4 = vector.broadcast %3 : vector<1x128xf32> to vector<8x128xf32>
    %5 = arith.addf %2, %4 : vector<8x128xf32>
    %cst_5 = arith.constant 0.000000e+00 : f32
    %6 = vector.broadcast %cst_5 : f32 to vector<8x128xf32>
    %7 = arith.maximumf %5, %6 : vector<8x128xf32>
    %c0_6 = arith.constant 0 : index
    %c0_7 = arith.constant 0 : index
    %8 = vector.load %arg9[%c0_6, %c0_7] : memref<8x128xf32, #tpu.memory_space<vmem>>, vector<8x128xf32>
    tpu.vector_store %arg9[%c0_6, %c0_7], %7 {strides = array<i32>} : memref<8x128xf32, #tpu.memory_space<vmem>>, vector<8x128xf32>,
    %c0_8 = arith.constant 0 : index
    %c0_9 = arith.constant 0 : index
    %9 = vector.load %arg9[%c0_8, %c0_9] : memref<8x128xf32, #tpu.memory_space<vmem>>, vector<8x128xf32>
    %c0_10 = arith.constant 0 : index
    %c0_11 = arith.constant 0 : index
    %10 = vector.load %arg4[%c0_10, %c0_11] : memref<128x128xf32, #tpu.memory_space<vmem>>, vector<128x128xf32>
    %cst_12 = arith.constant dense<0.000000e+00> : vector<8x128xf32>
    %11 = tpu.matmul %9, %10, %cst_12 {dimension_numbers = #tpu.dot_dimension_numbers<[1], [0], [0], [1], [0, 0, 1, 1], [], []>} : vector<8x128xf32>, vector<128x128xf32>, vector<8x128xf32> -> vector<8x128xf32>
    %c0_13 = arith.constant 0 : index
    %c0_14 = arith.constant 0 : index
    %12 = vector.load %arg5[%c0_13, %c0_14] : memref<1x128xf32, #tpu.memory_space<vmem>>, vector<1x128xf32>
    %13 = vector.broadcast %12 : vector<1x128xf32> to vector<8x128xf32>
    %14 = arith.addf %11, %13 : vector<8x128xf32>
    %cst_15 = arith.constant 0.000000e+00 : f32
    %15 = vector.broadcast %cst_15 : f32 to vector<8x128xf32>
    %16 = arith.maximumf %14, %15 : vector<8x128xf32>
    %c0_16 = arith.constant 0 : index
    %c0_17 = arith.constant 0 : index
    %17 = vector.load %arg9[%c0_16, %c0_17] : memref<8x128xf32, #tpu.memory_space<vmem>>, vector<8x128xf32>
    tpu.vector_store %arg9[%c0_16, %c0_17], %16 {strides = array<i32>} : memref<8x128xf32, #tpu.memory_space<vmem>>, vector<8x128xf32>,
    %c0_18 = arith.constant 0 : index
    %c0_19 = arith.constant 0 : index
    %18 = vector.load %arg9[%c0_18, %c0_19] : memref<8x128xf32, #tpu.memory_space<vmem>>, vector<8x128xf32>
    %c0_20 = arith.constant 0 : index
    %c0_21 = arith.constant 0 : index
    %19 = vector.load %arg6[%c0_20, %c0_21] : memref<128x128xf32, #tpu.memory_space<vmem>>, vector<128x128xf32>
    %cst_22 = arith.constant dense<0.000000e+00> : vector<8x128xf32>
    %20 = tpu.matmul %18, %19, %cst_22 {dimension_numbers = #tpu.dot_dimension_numbers<[1], [0], [0], [1], [0, 0, 1, 1], [], []>} : vector<8x128xf32>, vector<128x128xf32>, vector<8x128xf32> -> vector<8x128xf32>
    %c0_23 = arith.constant 0 : index
    %c0_24 = arith.constant 0 : index
    %21 = vector.load %arg7[%c0_23, %c0_24] : memref<1x128xf32, #tpu.memory_space<vmem>>, vector<1x128xf32>
    %22 = vector.broadcast %21 : vector<1x128xf32> to vector<8x128xf32>
    %23 = arith.addf %20, %22 : vector<8x128xf32>
    %c0_25 = arith.constant 0 : index
    %c0_26 = arith.constant 0 : index
    %24 = vector.load %arg8[%c0_25, %c0_26] : memref<8x128xf32, #tpu.memory_space<vmem>>, vector<8x128xf32>
    tpu.vector_store %arg8[%c0_25, %c0_26], %23 {strides = array<i32>} : memref<8x128xf32, #tpu.memory_space<vmem>>, vector<8x128xf32>,
    return
  }
  func.func @transform_0(%arg0: i32) -> (i32, i32) {
    %c0_i32 = arith.constant 0 : i32
    %c0_i32_0 = arith.constant 0 : i32
    return %arg0, %c0_i32 : i32, i32
  }
  func.func @transform_1(%arg0: i32) -> (i32, i32) {
    %c0_i32 = arith.constant 0 : i32
    %c0_i32_0 = arith.constant 0 : i32
    %c0_i32_1 = arith.constant 0 : i32
    return %c0_i32, %c0_i32_0 : i32, i32
  }
  func.func @transform_2(%arg0: i32) -> (i32, i32) {
    %c0_i32 = arith.constant 0 : i32
    %c0_i32_0 = arith.constant 0 : i32
    %c0_i32_1 = arith.constant 0 : i32
    return %c0_i32, %c0_i32_0 : i32, i32
  }
  func.func @transform_3(%arg0: i32) -> (i32, i32) {
    %c0_i32 = arith.constant 0 : i32
    %c0_i32_0 = arith.constant 0 : i32
    %c0_i32_1 = arith.constant 0 : i32
    return %c0_i32, %c0_i32_0 : i32, i32
  }
  func.func @transform_4(%arg0: i32) -> (i32, i32) {
    %c0_i32 = arith.constant 0 : i32
    %c0_i32_0 = arith.constant 0 : i32
    %c0_i32_1 = arith.constant 0 : i32
    return %c0_i32, %c0_i32_0 : i32, i32
  }
  func.func @transform_5(%arg0: i32) -> (i32, i32) {
    %c0_i32 = arith.constant 0 : i32
    %c0_i32_0 = arith.constant 0 : i32
    %c0_i32_1 = arith.constant 0 : i32
    return %c0_i32, %c0_i32_0 : i32, i32
  }
  func.func @transform_6(%arg0: i32) -> (i32, i32) {
    %c0_i32 = arith.constant 0 : i32
    %c0_i32_0 = arith.constant 0 : i32
    %c0_i32_1 = arith.constant 0 : i32
    return %c0_i32, %c0_i32_0 : i32, i32
  }
  func.func @transform_7(%arg0: i32) -> (i32, i32) {
    %c0_i32 = arith.constant 0 : i32
    %c0_i32_0 = arith.constant 0 : i32
    return %arg0, %c0_i32 : i32, i32
  }
}

module attributes {stable_mosaic.version = 11 : i64} {
  func.func @_fused_mlp_kernel(%arg0: i32, %arg1: memref<8x128xf32, #tpu.memory_space<vmem>>, %arg2: memref<128x128xf32, #tpu.memory_space<vmem>>, %arg3: memref<1x128xf32, #tpu.memory_space<vmem>>, %arg4: memref<128x128xf32, #tpu.memory_space<vmem>>, %arg5: memref<1x128xf32, #tpu.memory_space<vmem>>, %arg6: memref<128x128xf32, #tpu.memory_space<vmem>>, %arg7: memref<1x128xf32, #tpu.memory_space<vmem>>, %arg8: memref<8x128xf32, #tpu.memory_space<vmem>>, %arg9: memref<8x128xf32, #tpu.memory_space<vmem>>) attributes {dimension_semantics = [#tpu.dimension_semantics<parallel>], iteration_bounds = array<i64: 1>, scalar_prefetch = 0 : i64, scratch_operands = 1 : i64, tpu.core_type = #tpu.core_type<tc>, window_params = [{transform_indices = @transform_0, window_bounds = array<i64: 8, 128>}, {pipeline_mode = #tpu.pipeline_mode<synchronous>, transform_indices = @transform_1, window_bounds = array<i64: 128, 128>}, {pipeline_mode = #tpu.pipeline_mode<synchronous>, transform_indices = @transform_2, window_bounds = array<i64: 1, 128>}, {pipeline_mode = #tpu.pipeline_mode<synchronous>, transform_indices = @transform_3, window_bounds = array<i64: 128, 128>}, {pipeline_mode = #tpu.pipeline_mode<synchronous>, transform_indices = @transform_4, window_bounds = array<i64: 1, 128>}, {pipeline_mode = #tpu.pipeline_mode<synchronous>, transform_indices = @transform_5, window_bounds = array<i64: 128, 128>}, {pipeline_mode = #tpu.pipeline_mode<synchronous>, transform_indices = @transform_6, window_bounds = array<i64: 1, 128>}, {transform_indices = @transform_7, window_bounds = array<i64: 8, 128>}]} {
    %c0 = arith.constant 0 : index
    %c0_0 = arith.constant 0 : index
    %0 = vector.load %arg1[%c0, %c0_0] : memref<8x128xf32, #tpu.memory_space<vmem>>, vector<8x128xf32>
    %c0_1 = arith.constant 0 : index
    %c0_2 = arith.constant 0 : index
    %1 = vector.load %arg2[%c0_1, %c0_2] : memref<128x128xf32, #tpu.memory_space<vmem>>, vector<128x128xf32>
    %cst = arith.constant dense<0.000000e+00> : vector<8x128xf32>
    %2 = tpu.matmul %0, %1, %cst {dimension_numbers = #tpu.dot_dimension_numbers<[1], [0], [0], [1], [0, 0, 1, 1], [], []>} : vector<8x128xf32>, vector<128x128xf32>, vector<8x128xf32> -> vector<8x128xf32>
    %c0_3 = arith.constant 0 : index
    %c0_4 = arith.constant 0 : index
    %3 = vector.load %arg3[%c0_3, %c0_4] : memref<1x128xf32, #tpu.memory_space<vmem>>, vector<1x128xf32>
    %4 = vector.broadcast %3 : vector<1x128xf32> to vector<8x128xf32>
    %5 = arith.addf %2, %4 : vector<8x128xf32>
    %cst_5 = arith.constant 0.000000e+00 : f32
    %6 = vector.broadcast %cst_5 : f32 to vector<8x128xf32>
    %7 = arith.maximumf %5, %6 : vector<8x128xf32>
    %c0_6 = arith.constant 0 : index
    %c0_7 = arith.constant 0 : index
    %8 = vector.load %arg9[%c0_6, %c0_7] : memref<8x128xf32, #tpu.memory_space<vmem>>, vector<8x128xf32>
    tpu.vector_store %arg9[%c0_6, %c0_7], %7 {strides = array<i32>} : memref<8x128xf32, #tpu.memory_space<vmem>>, vector<8x128xf32>,
    %c0_8 = arith.constant 0 : index
    %c0_9 = arith.constant 0 : index
    %9 = vector.load %arg9[%c0_8, %c0_9] : memref<8x128xf32, #tpu.memory_space<vmem>>, vector<8x128xf32>
    %c0_10 = arith.constant 0 : index
    %c0_11 = arith.constant 0 : index
    %10 = vector.load %arg4[%c0_10, %c0_11] : memref<128x128xf32, #tpu.memory_space<vmem>>, vector<128x128xf32>
    %cst_12 = arith.constant dense<0.000000e+00> : vector<8x128xf32>
    %11 = tpu.matmul %9, %10, %cst_12 {dimension_numbers = #tpu.dot_dimension_numbers<[1], [0], [0], [1], [0, 0, 1, 1], [], []>} : vector<8x128xf32>, vector<128x128xf32>, vector<8x128xf32> -> vector<8x128xf32>
    %c0_13 = arith.constant 0 : index
    %c0_14 = arith.constant 0 : index
    %12 = vector.load %arg5[%c0_13, %c0_14] : memref<1x128xf32, #tpu.memory_space<vmem>>, vector<1x128xf32>
    %13 = vector.broadcast %12 : vector<1x128xf32> to vector<8x128xf32>
    %14 = arith.addf %11, %13 : vector<8x128xf32>
    %cst_15 = arith.constant 0.000000e+00 : f32
    %15 = vector.broadcast %cst_15 : f32 to vector<8x128xf32>
    %16 = arith.maximumf %14, %15 : vector<8x128xf32>
    %c0_16 = arith.constant 0 : index
    %c0_17 = arith.constant 0 : index
    %17 = vector.load %arg9[%c0_16, %c0_17] : memref<8x128xf32, #tpu.memory_space<vmem>>, vector<8x128xf32>
    tpu.vector_store %arg9[%c0_16, %c0_17], %16 {strides = array<i32>} : memref<8x128xf32, #tpu.memory_space<vmem>>, vector<8x128xf32>,
    %c0_18 = arith.constant 0 : index
    %c0_19 = arith.constant 0 : index
    %18 = vector.load %arg9[%c0_18, %c0_19] : memref<8x128xf32, #tpu.memory_space<vmem>>, vector<8x128xf32>
    %c0_20 = arith.constant 0 : index
    %c0_21 = arith.constant 0 : index
    %19 = vector.load %arg6[%c0_20, %c0_21] : memref<128x128xf32, #tpu.memory_space<vmem>>, vector<128x128xf32>
    %cst_22 = arith.constant dense<0.000000e+00> : vector<8x128xf32>
    %20 = tpu.matmul %18, %19, %cst_22 {dimension_numbers = #tpu.dot_dimension_numbers<[1], [0], [0], [1], [0, 0, 1, 1], [], []>} : vector<8x128xf32>, vector<128x128xf32>, vector<8x128xf32> -> vector<8x128xf32>
    %c0_23 = arith.constant 0 : index
    %c0_24 = arith.constant 0 : index
    %21 = vector.load %arg7[%c0_23, %c0_24] : memref<1x128xf32, #tpu.memory_space<vmem>>, vector<1x128xf32>
    %22 = vector.broadcast %21 : vector<1x128xf32> to vector<8x128xf32>
    %23 = arith.addf %20, %22 : vector<8x128xf32>
    %c0_25 = arith.constant 0 : index
    %c0_26 = arith.constant 0 : index
    %24 = vector.load %arg8[%c0_25, %c0_26] : memref<8x128xf32, #tpu.memory_space<vmem>>, vector<8x128xf32>
    tpu.vector_store %arg8[%c0_25, %c0_26], %23 {strides = array<i32>} : memref<8x128xf32, #tpu.memory_space<vmem>>, vector<8x128xf32>,
    return
  }
  func.func @transform_0(%arg0: i32) -> (i32, i32) {
    %c0_i32 = arith.constant 0 : i32
    %c0_i32_0 = arith.constant 0 : i32
    return %arg0, %c0_i32 : i32, i32
  }
  func.func @transform_1(%arg0: i32) -> (i32, i32) {
    %c0_i32 = arith.constant 0 : i32
    %c0_i32_0 = arith.constant 0 : i32
    %c0_i32_1 = arith.constant 0 : i32
    return %c0_i32, %c0_i32_0 : i32, i32
  }
  func.func @transform_2(%arg0: i32) -> (i32, i32) {
    %c0_i32 = arith.constant 0 : i32
    %c0_i32_0 = arith.constant 0 : i32
    %c0_i32_1 = arith.constant 0 : i32
    return %c0_i32, %c0_i32_0 : i32, i32
  }
  func.func @transform_3(%arg0: i32) -> (i32, i32) {
    %c0_i32 = arith.constant 0 : i32
    %c0_i32_0 = arith.constant 0 : i32
    %c0_i32_1 = arith.constant 0 : i32
    return %c0_i32, %c0_i32_0 : i32, i32
  }
  func.func @transform_4(%arg0: i32) -> (i32, i32) {
    %c0_i32 = arith.constant 0 : i32
    %c0_i32_0 = arith.constant 0 : i32
    %c0_i32_1 = arith.constant 0 : i32
    return %c0_i32, %c0_i32_0 : i32, i32
  }
  func.func @transform_5(%arg0: i32) -> (i32, i32) {
    %c0_i32 = arith.constant 0 : i32
    %c0_i32_0 = arith.constant 0 : i32
    %c0_i32_1 = arith.constant 0 : i32
    return %c0_i32, %c0_i32_0 : i32, i32
  }
  func.func @transform_6(%arg0: i32) -> (i32, i32) {
    %c0_i32 = arith.constant 0 : i32
    %c0_i32_0 = arith.constant 0 : i32
    %c0_i32_1 = arith.constant 0 : i32
    return %c0_i32, %c0_i32_0 : i32, i32
  }
  func.func @transform_7(%arg0: i32) -> (i32, i32) {
    %c0_i32 = arith.constant 0 : i32
    %c0_i32_0 = arith.constant 0 : i32
    return %arg0, %c0_i32 : i32, i32
  }
}

</mosaic_0001>

<llo_original>
// kernel: tpu_custom_call.1
$region0: #{tpu_custom_call.1}
  #allocation0 [shape = 'u32[]', space=smem, size = 0x4, offset = 0x4, fixed_abs, tag = 'smem constant byte address 0x4 - core index']
  #allocation1 [shape = 'u32[144,128]{1,0:T(1,128)}', space=vmem, size = 0x12000, scoped, tag = 'internal scratch']
  #allocation2 [shape = 'f32[8,128]{1,0:T(8,128)}', space=vmem, size = 0x1000, scoped, tag = 'scratch operand']
  %s0 = inlined_call_operand.hbm [shape: f32[8,128], index: 0, kind: input, shape index: {}]
  %s1 = inlined_call_operand.hbm [shape: f32[128,128], index: 1, kind: input, shape index: {}]
  %s2 = inlined_call_operand.vmem [shape: f32[1,128], index: 2, kind: input, shape index: {}]
  %s3 = inlined_call_operand.hbm [shape: f32[128,128], index: 3, kind: input, shape index: {}]
  %s4 = inlined_call_operand.vmem [shape: f32[1,128], index: 4, kind: input, shape index: {}]
  %s5 = inlined_call_operand.hbm [shape: f32[128,128], index: 5, kind: input, shape index: {}]
  %s6 = inlined_call_operand.vmem [shape: f32[1,128], index: 6, kind: input, shape index: {}]
  %s7 = inlined_call_operand.hbm [shape: f32[8,128], index: 7, kind: output, shape index: {}]
  %s8 = sld [smem:[#allocation0]]
  $region54: #{tpu_custom_call.1} parent=0
    _
  %s10 = ssub.s32 1, %s8
  %s11 = scalar_select 0, %s10, %s8
  $region1: #{tpu_custom_call.1} parent=0
    #allocation3 [shape = 'u8[4096]{0}', space=vmem, size = 0x1000, scoped, tag = 'input window, operand 0, single buffered']
    #allocation4 [shape = 's32[1]{0}', space=sflag, size = 0x4, scoped, tag = 'scoped memory for tpu_custom_call.1']
    #allocation5 [shape = 's32[1]{0}', space=sflag, size = 0x4, scoped, tag = 'scoped memory for tpu_custom_call.1']
    #allocation6 [shape = 'u8[65536]{0}', space=vmem, size = 0x10000, scoped, tag = 'input window, operand 1, single buffered']
    #allocation7 [shape = 's32[1]{0}', space=sflag, size = 0x4, scoped, tag = 'scoped memory for tpu_custom_call.1']
    #allocation8 [shape = 'u8[65536]{0}', space=vmem, size = 0x10000, scoped, tag = 'input window, operand 3, single buffered']
    #allocation9 [shape = 'u8[65536]{0}', space=vmem, size = 0x10000, scoped, tag = 'input window, operand 5, single buffered']
    #allocation10 [shape = 's32[1]{0}', space=sflag, size = 0x4, scoped, tag = 'scoped memory for tpu_custom_call.1']
    #allocation11 [shape = 'u8[4096]{0}', space=vmem, size = 0x1000, scoped, tag = 'output window, operand 0, single buffered']
    %12 = vsyncpa [#allocation4], 0
    %13 = vsyncpa [#allocation7], 0
    %14 = vsyncpa [#allocation10], 0
    %15 = vsyncpa [#allocation5], 0
    // Predicated region
    $region2: #{tpu_custom_call.1} parent=1 // pred_check
      _
    $region3: #{tpu_custom_call.1} parent=1 // pred_check_branch
      %17 = sbr.rel (0) target = $region5
    $region4: #{tpu_custom_call.1} parent=1 // pred_region
      %s19 = ssub.s32 128, 128
      %20 = vsyncadd [#allocation4], %s19
      %s22 = sshll.u32 [#allocation3], 4
      %s23 = int_to_ptr.vmem [resolvable:$true] %s22
      %25 = dma.hbm_to_vmem [thread:$0]  %s0, 128, %s23, [#allocation4]
    $region5: #{tpu_custom_call.1} parent=1 // pred_fallthru
      _
    // Predicated region
    $region6: #{tpu_custom_call.1} parent=1 // pred_check
      _
    $region7: #{tpu_custom_call.1} parent=1 // pred_check_branch
      %27 = sbr.rel (0) target = $region9
    $region8: #{tpu_custom_call.1} parent=1 // pred_region
      %s29 = ssub.s32 2048, 2048
      %30 = vsyncadd [#allocation7], %s29
      %s31 = sshll.u32 [#allocation6], 4
      %s32 = int_to_ptr.vmem [resolvable:$true] %s31
      %37 = dma.hbm_to_vmem [thread:$0]  %s1, 2048, %s32, [#allocation7], 128, 128, 8
    $region9: #{tpu_custom_call.1} parent=1 // pred_fallthru
      _
    // Predicated region
    $region10: #{tpu_custom_call.1} parent=1 // pred_check
      _
    $region11: #{tpu_custom_call.1} parent=1 // pred_check_branch
      %39 = sbr.rel (0) target = $region13
    $region12: #{tpu_custom_call.1} parent=1 // pred_region
      _
    $region13: #{tpu_custom_call.1} parent=1 // pred_fallthru
      _
    // Predicated region
    $region14: #{tpu_custom_call.1} parent=1 // pred_check
      _
    $region15: #{tpu_custom_call.1} parent=1 // pred_check_branch
      %41 = sbr.rel (0) target = $region17
    $region16: #{tpu_custom_call.1} parent=1 // pred_region
      %s43 = ssub.s32 2048, 2048
      %44 = vsyncadd [#allocation7], %s43
      %s45 = sshll.u32 [#allocation8], 4
      %s46 = int_to_ptr.vmem [resolvable:$true] %s45
      %51 = dma.hbm_to_vmem [thread:$0]  %s3, 2048, %s46, [#allocation7], 128, 128, 8
    $region17: #{tpu_custom_call.1} parent=1 // pred_fallthru
      _
    // Predicated region
    $region18: #{tpu_custom_call.1} parent=1 // pred_check
      _
    $region19: #{tpu_custom_call.1} parent=1 // pred_check_branch
      %53 = sbr.rel (0) target = $region21
    $region20: #{tpu_custom_call.1} parent=1 // pred_region
      _
    $region21: #{tpu_custom_call.1} parent=1 // pred_fallthru
      _
    // Predicated region
    $region22: #{tpu_custom_call.1} parent=1 // pred_check
      _
    $region23: #{tpu_custom_call.1} parent=1 // pred_check_branch
      %55 = sbr.rel (0) target = $region25
    $region24: #{tpu_custom_call.1} parent=1 // pred_region
      %s57 = ssub.s32 2048, 2048
      %58 = vsyncadd [#allocation10], %s57
      %s59 = sshll.u32 [#allocation9], 4
      %s60 = int_to_ptr.vmem [resolvable:$true] %s59
      %65 = dma.hbm_to_vmem [thread:$0]  %s5, 2048, %s60, [#allocation10], 128, 128, 8
    $region25: #{tpu_custom_call.1} parent=1 // pred_fallthru
      _
    // Predicated region
    $region26: #{tpu_custom_call.1} parent=1 // pred_check
      _
    $region27: #{tpu_custom_call.1} parent=1 // pred_check_branch
      %67 = sbr.rel (0) target = $region29
    $region28: #{tpu_custom_call.1} parent=1 // pred_region
      _
    $region29: #{tpu_custom_call.1} parent=1 // pred_fallthru
      _
    // Predicated region
    $region30: #{tpu_custom_call.1} parent=1 // pred_check
      _
    $region31: #{tpu_custom_call.1} parent=1 // pred_check_branch
      %69 = sbr.rel (0) target = $region33
    $region32: #{tpu_custom_call.1} parent=1 // pred_region
      %70 = dma.done [#allocation4], 128
    $region33: #{tpu_custom_call.1} parent=1 // pred_fallthru
      _
    // Predicated region
    $region34: #{tpu_custom_call.1} parent=1 // pred_check
      _
    $region35: #{tpu_custom_call.1} parent=1 // pred_check_branch
      %72 = sbr.rel (0) target = $region37
    $region36: #{tpu_custom_call.1} parent=1 // pred_region
      %73 = dma.done [#allocation7], 2048
    $region37: #{tpu_custom_call.1} parent=1 // pred_fallthru
      _
    // Predicated region
    $region38: #{tpu_custom_call.1} parent=1 // pred_check
      _
    $region39: #{tpu_custom_call.1} parent=1 // pred_check_branch
      %75 = sbr.rel (0) target = $region41
    $region40: #{tpu_custom_call.1} parent=1 // pred_region
      %76 = dma.done [#allocation7], 2048
    $region41: #{tpu_custom_call.1} parent=1 // pred_fallthru
      _
    // Predicated region
    $region42: #{tpu_custom_call.1} parent=1 // pred_check
      _
    $region43: #{tpu_custom_call.1} parent=1 // pred_check_branch
      %78 = sbr.rel (0) target = $region45
    $region44: #{tpu_custom_call.1} parent=1 // pred_region
      %79 = dma.done [#allocation10], 2048
    $region45: #{tpu_custom_call.1} parent=1 // pred_fallthru
      _
    %v80 = vld [vmem:[#allocation3] sm:$0xff]
    %v81 = vld [vmem:[#allocation6] sm:$0xff]
    %v82 = vld [vmem:[#allocation6 + $0x8] sm:$0xff]
    %v83 = vld [vmem:[#allocation6 + $0x10] sm:$0xff]
    %v84 = vld [vmem:[#allocation6 + $0x18] sm:$0xff]
    %v85 = vld [vmem:[#allocation6 + $0x20] sm:$0xff]
    %v86 = vld [vmem:[#allocation6 + $0x28] sm:$0xff]
    %v87 = vld [vmem:[#allocation6 + $0x30] sm:$0xff]
    %v88 = vld [vmem:[#allocation6 + $0x38] sm:$0xff]
    %v89 = vld [vmem:[#allocation6 + $0x40] sm:$0xff]
    %v90 = vld [vmem:[#allocation6 + $0x48] sm:$0xff]
    %v91 = vld [vmem:[#allocation6 + $0x50] sm:$0xff]
    %v92 = vld [vmem:[#allocation6 + $0x58] sm:$0xff]
    %v93 = vld [vmem:[#allocation6 + $0x60] sm:$0xff]
    %v94 = vld [vmem:[#allocation6 + $0x68] sm:$0xff]
    %v95 = vld [vmem:[#allocation6 + $0x70] sm:$0xff]
    %v96 = vld [vmem:[#allocation6 + $0x78] sm:$0xff]
    %v97 = vld [vmem:[%s2] sm:$0x1]
    %v99 = vlaneseq
    %v100 = vshrl.u32 %v99, 7
    %v101 = vsub.s32 0, %v100
    %v102 = vrot.slane %v97, %v101
    %104 = vmatprep.subr.mxu0 0.0
    %105 = vmatpush1.msra.mxu0 %v81
    %106 = vmatprep.subr.mxu0 0.0
    %107 = vmatpush1.msra.mxu0 %v82
    %108 = vmatprep.subr.mxu0 0.0
    %109 = vmatpush1.msra.mxu0 %v83
    %110 = vmatprep.subr.mxu0 0.0
    %111 = vmatpush1.msra.mxu0 %v84
    %112 = vmatprep.subr.mxu0 0.0
    %113 = vmatpush1.msra.mxu0 %v85
    %114 = vmatprep.subr.mxu0 0.0
    %115 = vmatpush1.msra.mxu0 %v86
    %116 = vmatprep.subr.mxu0 0.0
    %117 = vmatpush1.msra.mxu0 %v87
    %118 = vmatprep.subr.mxu0 0.0
    %119 = vmatpush1.msra.mxu0 %v88
    %120 = vmatprep.subr.mxu0 0.0
    %121 = vmatpush1.msra.mxu0 %v89
    %122 = vmatprep.subr.mxu0 0.0
    %123 = vmatpush1.msra.mxu0 %v90
    %124 = vmatprep.subr.mxu0 0.0
    %125 = vmatpush1.msra.mxu0 %v91
    %126 = vmatprep.subr.mxu0 0.0
    %127 = vmatpush1.msra.mxu0 %v92
    %128 = vmatprep.subr.mxu0 0.0
    %129 = vmatpush1.msra.mxu0 %v93
    %130 = vmatprep.subr.mxu0 0.0
    %131 = vmatpush1.msra.mxu0 %v94
    %132 = vmatprep.subr.mxu0 0.0
    %133 = vmatpush1.msra.mxu0 %v95
    %134 = vmatprep.subr.mxu0 0.0
    %135 = vmatpush1.msra.mxu0 %v96
    %136 = vmatprep.subr.mxu0 0.0
    %137 = vmatpush1.msra.mxu0 0.0
    %138 = vmatprep.subr.mxu0 0.0
    %139 = vmatpush1.msra.mxu0 0.0
    %140 = vmatprep.subr.mxu0 0.0
    %141 = vmatpush1.msra.mxu0 0.0
    %142 = vmatprep.subr.mxu0 0.0
    %143 = vmatpush1.msra.mxu0 0.0
    %144 = vmatprep.subr.mxu0 0.0
    %145 = vmatpush1.msra.mxu0 0.0
    %146 = vmatprep.subr.mxu0 0.0
    %147 = vmatpush1.msra.mxu0 0.0
    %148 = vmatprep.subr.mxu0 0.0
    %149 = vmatpush1.msra.mxu0 0.0
    %150 = vmatprep.subr.mxu0 0.0
    %151 = vmatpush1.msra.mxu0 0.0
    %152 = vmatprep.subr.mxu0 0.0
    %153 = vmatpush1.msra.mxu0 0.0
    %154 = vmatprep.subr.mxu0 0.0
    %155 = vmatpush1.msra.mxu0 0.0
    %156 = vmatprep.subr.mxu0 0.0
    %157 = vmatpush1.msra.mxu0 0.0
    %158 = vmatprep.subr.mxu0 0.0
    %159 = vmatpush1.msra.mxu0 0.0
    %160 = vmatprep.subr.mxu0 0.0
    %161 = vmatpush1.msra.mxu0 0.0
    %162 = vmatprep.subr.mxu0 0.0
    %163 = vmatpush1.msra.mxu0 0.0
    %164 = vmatprep.subr.mxu0 0.0
    %165 = vmatpush1.msra.mxu0 0.0
    %166 = vmatprep.subr.mxu0 0.0
    %167 = vmatpush1.msra.mxu0 0.0
    %168 = vmatprep.mubr.f32.mxu0 0.0
    %169 = vmatmul.mubr.f32.gmra.mrb[0].mxu0 %v80
    %v170 = vpop.f32.mrb[0].mxu0
    %v171 = vadd.f32 %v102, %v170
    %v172 = vpop.f32.mrb[0].mxu0
    %173 = vdwg.mxu0
    %v174 = vmax.f32 %v171, 0.0
    %175 = vst [vmem:[#allocation2] sm:$0xff] %v174
    %v176 = vld [vmem:[#allocation2] sm:$0xff]
    %v177 = vld [vmem:[#allocation8] sm:$0xff]
    %v178 = vld [vmem:[#allocation8 + $0x8] sm:$0xff]
    %v179 = vld [vmem:[#allocation8 + $0x10] sm:$0xff]
    %v180 = vld [vmem:[#allocation8 + $0x18] sm:$0xff]
    %v181 = vld [vmem:[#allocation8 + $0x20] sm:$0xff]
    %v182 = vld [vmem:[#allocation8 + $0x28] sm:$0xff]
    %v183 = vld [vmem:[#allocation8 + $0x30] sm:$0xff]
    %v184 = vld [vmem:[#allocation8 + $0x38] sm:$0xff]
    %v185 = vld [vmem:[#allocation8 + $0x40] sm:$0xff]
    %v186 = vld [vmem:[#allocation8 + $0x48] sm:$0xff]
    %v187 = vld [vmem:[#allocation8 + $0x50] sm:$0xff]
    %v188 = vld [vmem:[#allocation8 + $0x58] sm:$0xff]
    %v189 = vld [vmem:[#allocation8 + $0x60] sm:$0xff]
    %v190 = vld [vmem:[#allocation8 + $0x68] sm:$0xff]
    %v191 = vld [vmem:[#allocation8 + $0x70] sm:$0xff]
    %v192 = vld [vmem:[#allocation8 + $0x78] sm:$0xff]
    %v193 = vld [vmem:[%s4] sm:$0x1]
    %v195 = vlaneseq
    %v196 = vshrl.u32 %v195, 7
    %v197 = vsub.s32 0, %v196
    %v198 = vrot.slane %v193, %v197
    %200 = vmatprep.subr.mxu0 0.0
    %201 = vmatpush1.msra.mxu0 %v177
    %202 = vmatprep.subr.mxu0 0.0
    %203 = vmatpush1.msra.mxu0 %v178
    %204 = vmatprep.subr.mxu0 0.0
    %205 = vmatpush1.msra.mxu0 %v179
    %206 = vmatprep.subr.mxu0 0.0
    %207 = vmatpush1.msra.mxu0 %v180
    %208 = vmatprep.subr.mxu0 0.0
    %209 = vmatpush1.msra.mxu0 %v181
    %210 = vmatprep.subr.mxu0 0.0
    %211 = vmatpush1.msra.mxu0 %v182
    %212 = vmatprep.subr.mxu0 0.0
    %213 = vmatpush1.msra.mxu0 %v183
    %214 = vmatprep.subr.mxu0 0.0
    %215 = vmatpush1.msra.mxu0 %v184
    %216 = vmatprep.subr.mxu0 0.0
    %217 = vmatpush1.msra.mxu0 %v185
    %218 = vmatprep.subr.mxu0 0.0
    %219 = vmatpush1.msra.mxu0 %v186
    %220 = vmatprep.subr.mxu0 0.0
    %221 = vmatpush1.msra.mxu0 %v187
    %222 = vmatprep.subr.mxu0 0.0
    %223 = vmatpush1.msra.mxu0 %v188
    %224 = vmatprep.subr.mxu0 0.0
    %225 = vmatpush1.msra.mxu0 %v189
    %226 = vmatprep.subr.mxu0 0.0
    %227 = vmatpush1.msra.mxu0 %v190
    %228 = vmatprep.subr.mxu0 0.0
    %229 = vmatpush1.msra.mxu0 %v191
    %230 = vmatprep.subr.mxu0 0.0
    %231 = vmatpush1.msra.mxu0 %v192
    %232 = vmatprep.subr.mxu0 0.0
    %233 = vmatpush1.msra.mxu0 0.0
    %234 = vmatprep.subr.mxu0 0.0
    %235 = vmatpush1.msra.mxu0 0.0
    %236 = vmatprep.subr.mxu0 0.0
    %237 = vmatpush1.msra.mxu0 0.0
    %238 = vmatprep.subr.mxu0 0.0
    %239 = vmatpush1.msra.mxu0 0.0
    %240 = vmatprep.subr.mxu0 0.0
    %241 = vmatpush1.msra.mxu0 0.0
    %242 = vmatprep.subr.mxu0 0.0
    %243 = vmatpush1.msra.mxu0 0.0
    %244 = vmatprep.subr.mxu0 0.0
    %245 = vmatpush1.msra.mxu0 0.0
    %246 = vmatprep.subr.mxu0 0.0
    %247 = vmatpush1.msra.mxu0 0.0
    %248 = vmatprep.subr.mxu0 0.0
    %249 = vmatpush1.msra.mxu0 0.0
    %250 = vmatprep.subr.mxu0 0.0
    %251 = vmatpush1.msra.mxu0 0.0
    %252 = vmatprep.subr.mxu0 0.0
    %253 = vmatpush1.msra.mxu0 0.0
    %254 = vmatprep.subr.mxu0 0.0
    %255 = vmatpush1.msra.mxu0 0.0
    %256 = vmatprep.subr.mxu0 0.0
    %257 = vmatpush1.msra.mxu0 0.0
    %258 = vmatprep.subr.mxu0 0.0
    %259 = vmatpush1.msra.mxu0 0.0
    %260 = vmatprep.subr.mxu0 0.0
    %261 = vmatpush1.msra.mxu0 0.0
    %262 = vmatprep.subr.mxu0 0.0
    %263 = vmatpush1.msra.mxu0 0.0
    %264 = vmatprep.mubr.f32.mxu0 0.0
    %265 = vmatmul.mubr.f32.gmra.mrb[0].mxu0 %v176
    %v266 = vpop.f32.mrb[0].mxu0
    %v267 = vadd.f32 %v198, %v266
    %v268 = vpop.f32.mrb[0].mxu0
    %269 = vdwg.mxu0
    %v270 = vmax.f32 %v267, 0.0
    %271 = vst [vmem:[#allocation2] sm:$0xff] %v270
    %v272 = vld [vmem:[#allocation2] sm:$0xff]
    %v273 = vld [vmem:[#allocation9] sm:$0xff]
    %v274 = vld [vmem:[#allocation9 + $0x8] sm:$0xff]
    %v275 = vld [vmem:[#allocation9 + $0x10] sm:$0xff]
    %v276 = vld [vmem:[#allocation9 + $0x18] sm:$0xff]
    %v277 = vld [vmem:[#allocation9 + $0x20] sm:$0xff]
    %v278 = vld [vmem:[#allocation9 + $0x28] sm:$0xff]
    %v279 = vld [vmem:[#allocation9 + $0x30] sm:$0xff]
    %v280 = vld [vmem:[#allocation9 + $0x38] sm:$0xff]
    %v281 = vld [vmem:[#allocation9 + $0x40] sm:$0xff]
    %v282 = vld [vmem:[#allocation9 + $0x48] sm:$0xff]
    %v283 = vld [vmem:[#allocation9 + $0x50] sm:$0xff]
    %v284 = vld [vmem:[#allocation9 + $0x58] sm:$0xff]
    %v285 = vld [vmem:[#allocation9 + $0x60] sm:$0xff]
    %v286 = vld [vmem:[#allocation9 + $0x68] sm:$0xff]
    %v287 = vld [vmem:[#allocation9 + $0x70] sm:$0xff]
    %v288 = vld [vmem:[#allocation9 + $0x78] sm:$0xff]
    %v289 = vld [vmem:[%s6] sm:$0x1]
    %v291 = vlaneseq
    %v292 = vshrl.u32 %v291, 7
    %v293 = vsub.s32 0, %v292
    %v294 = vrot.slane %v289, %v293
    %296 = vmatprep.subr.mxu0 0.0
    %297 = vmatpush1.msra.mxu0 %v273
    %298 = vmatprep.subr.mxu0 0.0
    %299 = vmatpush1.msra.mxu0 %v274
    %300 = vmatprep.subr.mxu0 0.0
    %301 = vmatpush1.msra.mxu0 %v275
    %302 = vmatprep.subr.mxu0 0.0
    %303 = vmatpush1.msra.mxu0 %v276
    %304 = vmatprep.subr.mxu0 0.0
    %305 = vmatpush1.msra.mxu0 %v277
    %306 = vmatprep.subr.mxu0 0.0
    %307 = vmatpush1.msra.mxu0 %v278
    %308 = vmatprep.subr.mxu0 0.0
    %309 = vmatpush1.msra.mxu0 %v279
    %310 = vmatprep.subr.mxu0 0.0
    %311 = vmatpush1.msra.mxu0 %v280
    %312 = vmatprep.subr.mxu0 0.0
    %313 = vmatpush1.msra.mxu0 %v281
    %314 = vmatprep.subr.mxu0 0.0
    %315 = vmatpush1.msra.mxu0 %v282
    %316 = vmatprep.subr.mxu0 0.0
    %317 = vmatpush1.msra.mxu0 %v283
    %318 = vmatprep.subr.mxu0 0.0
    %319 = vmatpush1.msra.mxu0 %v284
    %320 = vmatprep.subr.mxu0 0.0
    %321 = vmatpush1.msra.mxu0 %v285
    %322 = vmatprep.subr.mxu0 0.0
    %323 = vmatpush1.msra.mxu0 %v286
    %324 = vmatprep.subr.mxu0 0.0
    %325 = vmatpush1.msra.mxu0 %v287
    %326 = vmatprep.subr.mxu0 0.0
    %327 = vmatpush1.msra.mxu0 %v288
    %328 = vmatprep.subr.mxu0 0.0
    %329 = vmatpush1.msra.mxu0 0.0
    %330 = vmatprep.subr.mxu0 0.0
    %331 = vmatpush1.msra.mxu0 0.0
    %332 = vmatprep.subr.mxu0 0.0
    %333 = vmatpush1.msra.mxu0 0.0
    %334 = vmatprep.subr.mxu0 0.0
    %335 = vmatpush1.msra.mxu0 0.0
    %336 = vmatprep.subr.mxu0 0.0
    %337 = vmatpush1.msra.mxu0 0.0
    %338 = vmatprep.subr.mxu0 0.0
    %339 = vmatpush1.msra.mxu0 0.0
    %340 = vmatprep.subr.mxu0 0.0
    %341 = vmatpush1.msra.mxu0 0.0
    %342 = vmatprep.subr.mxu0 0.0
    %343 = vmatpush1.msra.mxu0 0.0
    %344 = vmatprep.subr.mxu0 0.0
    %345 = vmatpush1.msra.mxu0 0.0
    %346 = vmatprep.subr.mxu0 0.0
    %347 = vmatpush1.msra.mxu0 0.0
    %348 = vmatprep.subr.mxu0 0.0
    %349 = vmatpush1.msra.mxu0 0.0
    %350 = vmatprep.subr.mxu0 0.0
    %351 = vmatpush1.msra.mxu0 0.0
    %352 = vmatprep.subr.mxu0 0.0
    %353 = vmatpush1.msra.mxu0 0.0
    %354 = vmatprep.subr.mxu0 0.0
    %355 = vmatpush1.msra.mxu0 0.0
    %356 = vmatprep.subr.mxu0 0.0
    %357 = vmatpush1.msra.mxu0 0.0
    %358 = vmatprep.subr.mxu0 0.0
    %359 = vmatpush1.msra.mxu0 0.0
    %360 = vmatprep.mubr.f32.mxu0 0.0
    %361 = vmatmul.mubr.f32.gmra.mrb[0].mxu0 %v272
    %v362 = vpop.f32.mrb[0].mxu0
    %v363 = vadd.f32 %v294, %v362
    %v364 = vpop.f32.mrb[0].mxu0
    %365 = vdwg.mxu0
    %366 = vst [vmem:[#allocation11] sm:$0xff] %v363
    // Predicated region
    $region46: #{tpu_custom_call.1} parent=1 // pred_check
      _
    $region47: #{tpu_custom_call.1} parent=1 // pred_check_branch
      %368 = sbr.rel (0) target = $region49
    $region48: #{tpu_custom_call.1} parent=1 // pred_region
      %s370 = ssub.s32 128, 128
      %371 = vsyncadd [#allocation5], %s370
      %s373 = sshll.u32 [#allocation11], 4
      %s374 = int_to_ptr.vmem [resolvable:$true] %s373
      %376 = dma.vmem_to_hbm [thread:$0]  %s374, 128, %s7, [#allocation5]
    $region49: #{tpu_custom_call.1} parent=1 // pred_fallthru
      _
    // Predicated region
    $region50: #{tpu_custom_call.1} parent=1 // pred_check
      _
    $region51: #{tpu_custom_call.1} parent=1 // pred_check_branch
      %378 = sbr.rel (0) target = $region53
    $region52: #{tpu_custom_call.1} parent=1 // pred_region
      %379 = dma.done [#allocation5], 128
    $region53: #{tpu_custom_call.1} parent=1 // pred_fallthru
      _
    %380 = vsyncpa [#allocation4], 1
    %381 = vsyncpa [#allocation7], 1
    %382 = vsyncpa [#allocation10], 1
    %383 = vsyncpa [#allocation5], 1

// kernel: tpu_custom_call.1
$region0: #{tpu_custom_call.1}
  #allocation0 [shape = 'u32[]', space=smem, size = 0x4, offset = 0x4, fixed_abs, tag = 'smem constant byte address 0x4 - core index']
  #allocation1 [shape = 'u32[144,128]{1,0:T(1,128)}', space=vmem, size = 0x12000, scoped, tag = 'internal scratch']
  #allocation2 [shape = 'f32[8,128]{1,0:T(8,128)}', space=vmem, size = 0x1000, scoped, tag = 'scratch operand']
  %s0 = inlined_call_operand.hbm [shape: f32[8,128], index: 0, kind: input, shape index: {}]
  %s1 = inlined_call_operand.hbm [shape: f32[128,128], index: 1, kind: input, shape index: {}]
  %s2 = inlined_call_operand.vmem [shape: f32[1,128], index: 2, kind: input, shape index: {}]
  %s3 = inlined_call_operand.hbm [shape: f32[128,128], index: 3, kind: input, shape index: {}]
  %s4 = inlined_call_operand.vmem [shape: f32[1,128], index: 4, kind: input, shape index: {}]
  %s5 = inlined_call_operand.hbm [shape: f32[128,128], index: 5, kind: input, shape index: {}]
  %s6 = inlined_call_operand.vmem [shape: f32[1,128], index: 6, kind: input, shape index: {}]
  %s7 = inlined_call_operand.hbm [shape: f32[8,128], index: 7, kind: output, shape index: {}]
  %s8 = sld [smem:[#allocation0]]
  $region54: #{tpu_custom_call.1} parent=0
    _
  %s10 = ssub.s32 1, %s8
  %s11 = scalar_select 0, %s10, %s8
  $region1: #{tpu_custom_call.1} parent=0
    #allocation3 [shape = 'u8[4096]{0}', space=vmem, size = 0x1000, scoped, tag = 'input window, operand 0, single buffered']
    #allocation4 [shape = 's32[1]{0}', space=sflag, size = 0x4, scoped, tag = 'scoped memory for tpu_custom_call.1']
    #allocation5 [shape = 's32[1]{0}', space=sflag, size = 0x4, scoped, tag = 'scoped memory for tpu_custom_call.1']
    #allocation6 [shape = 'u8[65536]{0}', space=vmem, size = 0x10000, scoped, tag = 'input window, operand 1, single buffered']
    #allocation7 [shape = 's32[1]{0}', space=sflag, size = 0x4, scoped, tag = 'scoped memory for tpu_custom_call.1']
    #allocation8 [shape = 'u8[65536]{0}', space=vmem, size = 0x10000, scoped, tag = 'input window, operand 3, single buffered']
    #allocation9 [shape = 'u8[65536]{0}', space=vmem, size = 0x10000, scoped, tag = 'input window, operand 5, single buffered']
    #allocation10 [shape = 's32[1]{0}', space=sflag, size = 0x4, scoped, tag = 'scoped memory for tpu_custom_call.1']
    #allocation11 [shape = 'u8[4096]{0}', space=vmem, size = 0x1000, scoped, tag = 'output window, operand 0, single buffered']
    %12 = vsyncpa [#allocation4], 0
    %13 = vsyncpa [#allocation7], 0
    %14 = vsyncpa [#allocation10], 0
    %15 = vsyncpa [#allocation5], 0
    // Predicated region
    $region2: #{tpu_custom_call.1} parent=1 // pred_check
      _
    $region3: #{tpu_custom_call.1} parent=1 // pred_check_branch
      %17 = sbr.rel (0) target = $region5
    $region4: #{tpu_custom_call.1} parent=1 // pred_region
      %s19 = ssub.s32 128, 128
      %20 = vsyncadd [#allocation4], %s19
      %s22 = sshll.u32 [#allocation3], 4
      %s23 = int_to_ptr.vmem [resolvable:$true] %s22
      %25 = dma.hbm_to_vmem [thread:$0]  %s0, 128, %s23, [#allocation4]
    $region5: #{tpu_custom_call.1} parent=1 // pred_fallthru
      _
    // Predicated region
    $region6: #{tpu_custom_call.1} parent=1 // pred_check
      _
    $region7: #{tpu_custom_call.1} parent=1 // pred_check_branch
      %27 = sbr.rel (0) target = $region9
    $region8: #{tpu_custom_call.1} parent=1 // pred_region
      %s29 = ssub.s32 2048, 2048
      %30 = vsyncadd [#allocation7], %s29
      %s31 = sshll.u32 [#allocation6], 4
      %s32 = int_to_ptr.vmem [resolvable:$true] %s31
      %37 = dma.hbm_to_vmem [thread:$0]  %s1, 2048, %s32, [#allocation7], 128, 128, 8
    $region9: #{tpu_custom_call.1} parent=1 // pred_fallthru
      _
    // Predicated region
    $region10: #{tpu_custom_call.1} parent=1 // pred_check
      _
    $region11: #{tpu_custom_call.1} parent=1 // pred_check_branch
      %39 = sbr.rel (0) target = $region13
    $region12: #{tpu_custom_call.1} parent=1 // pred_region
      _
    $region13: #{tpu_custom_call.1} parent=1 // pred_fallthru
      _
    // Predicated region
    $region14: #{tpu_custom_call.1} parent=1 // pred_check
      _
    $region15: #{tpu_custom_call.1} parent=1 // pred_check_branch
      %41 = sbr.rel (0) target = $region17
    $region16: #{tpu_custom_call.1} parent=1 // pred_region
      %s43 = ssub.s32 2048, 2048
      %44 = vsyncadd [#allocation7], %s43
      %s45 = sshll.u32 [#allocation8], 4
      %s46 = int_to_ptr.vmem [resolvable:$true] %s45
      %51 = dma.hbm_to_vmem [thread:$0]  %s3, 2048, %s46, [#allocation7], 128, 128, 8
    $region17: #{tpu_custom_call.1} parent=1 // pred_fallthru
      _
    // Predicated region
    $region18: #{tpu_custom_call.1} parent=1 // pred_check
      _
    $region19: #{tpu_custom_call.1} parent=1 // pred_check_branch
      %53 = sbr.rel (0) target = $region21
    $region20: #{tpu_custom_call.1} parent=1 // pred_region
      _
    $region21: #{tpu_custom_call.1} parent=1 // pred_fallthru
      _
    // Predicated region
    $region22: #{tpu_custom_call.1} parent=1 // pred_check
      _
    $region23: #{tpu_custom_call.1} parent=1 // pred_check_branch
      %55 = sbr.rel (0) target = $region25
    $region24: #{tpu_custom_call.1} parent=1 // pred_region
      %s57 = ssub.s32 2048, 2048
      %58 = vsyncadd [#allocation10], %s57
      %s59 = sshll.u32 [#allocation9], 4
      %s60 = int_to_ptr.vmem [resolvable:$true] %s59
      %65 = dma.hbm_to_vmem [thread:$0]  %s5, 2048, %s60, [#allocation10], 128, 128, 8
    $region25: #{tpu_custom_call.1} parent=1 // pred_fallthru
      _
    // Predicated region
    $region26: #{tpu_custom_call.1} parent=1 // pred_check
      _
    $region27: #{tpu_custom_call.1} parent=1 // pred_check_branch
      %67 = sbr.rel (0) target = $region29
    $region28: #{tpu_custom_call.1} parent=1 // pred_region
      _
    $region29: #{tpu_custom_call.1} parent=1 // pred_fallthru
      _
    // Predicated region
    $region30: #{tpu_custom_call.1} parent=1 // pred_check
      _
    $region31: #{tpu_custom_call.1} parent=1 // pred_check_branch
      %69 = sbr.rel (0) target = $region33
    $region32: #{tpu_custom_call.1} parent=1 // pred_region
      %70 = dma.done [#allocation4], 128
    $region33: #{tpu_custom_call.1} parent=1 // pred_fallthru
      _
    // Predicated region
    $region34: #{tpu_custom_call.1} parent=1 // pred_check
      _
    $region35: #{tpu_custom_call.1} parent=1 // pred_check_branch
      %72 = sbr.rel (0) target = $region37
    $region36: #{tpu_custom_call.1} parent=1 // pred_region
      %73 = dma.done [#allocation7], 2048
    $region37: #{tpu_custom_call.1} parent=1 // pred_fallthru
      _
    // Predicated region
    $region38: #{tpu_custom_call.1} parent=1 // pred_check
      _
    $region39: #{tpu_custom_call.1} parent=1 // pred_check_branch
      %75 = sbr.rel (0) target = $region41
    $region40: #{tpu_custom_call.1} parent=1 // pred_region
      %76 = dma.done [#allocation7], 2048
    $region41: #{tpu_custom_call.1} parent=1 // pred_fallthru
      _
    // Predicated region
    $region42: #{tpu_custom_call.1} parent=1 // pred_check
      _
    $region43: #{tpu_custom_call.1} parent=1 // pred_check_branch
      %78 = sbr.rel (0) target = $region45
    $region44: #{tpu_custom_call.1} parent=1 // pred_region
      %79 = dma.done [#allocation10], 2048
    $region45: #{tpu_custom_call.1} parent=1 // pred_fallthru
      _
    %v80 = vld [vmem:[#allocation3] sm:$0xff]
    %v81 = vld [vmem:[#allocation6] sm:$0xff]
    %v82 = vld [vmem:[#allocation6 + $0x8] sm:$0xff]
    %v83 = vld [vmem:[#allocation6 + $0x10] sm:$0xff]
    %v84 = vld [vmem:[#allocation6 + $0x18] sm:$0xff]
    %v85 = vld [vmem:[#allocation6 + $0x20] sm:$0xff]
    %v86 = vld [vmem:[#allocation6 + $0x28] sm:$0xff]
    %v87 = vld [vmem:[#allocation6 + $0x30] sm:$0xff]
    %v88 = vld [vmem:[#allocation6 + $0x38] sm:$0xff]
    %v89 = vld [vmem:[#allocation6 + $0x40] sm:$0xff]
    %v90 = vld [vmem:[#allocation6 + $0x48] sm:$0xff]
    %v91 = vld [vmem:[#allocation6 + $0x50] sm:$0xff]
    %v92 = vld [vmem:[#allocation6 + $0x58] sm:$0xff]
    %v93 = vld [vmem:[#allocation6 + $0x60] sm:$0xff]
    %v94 = vld [vmem:[#allocation6 + $0x68] sm:$0xff]
    %v95 = vld [vmem:[#allocation6 + $0x70] sm:$0xff]
    %v96 = vld [vmem:[#allocation6 + $0x78] sm:$0xff]
    %v97 = vld [vmem:[%s2] sm:$0x1]
    %v99 = vlaneseq
    %v100 = vshrl.u32 %v99, 7
    %v101 = vsub.s32 0, %v100
    %v102 = vrot.slane %v97, %v101
    %104 = vmatprep.subr.mxu0 0.0
    %105 = vmatpush1.msra.mxu0 %v81
    %106 = vmatprep.subr.mxu0 0.0
    %107 = vmatpush1.msra.mxu0 %v82
    %108 = vmatprep.subr.mxu0 0.0
    %109 = vmatpush1.msra.mxu0 %v83
    %110 = vmatprep.subr.mxu0 0.0
    %111 = vmatpush1.msra.mxu0 %v84
    %112 = vmatprep.subr.mxu0 0.0
    %113 = vmatpush1.msra.mxu0 %v85
    %114 = vmatprep.subr.mxu0 0.0
    %115 = vmatpush1.msra.mxu0 %v86
    %116 = vmatprep.subr.mxu0 0.0
    %117 = vmatpush1.msra.mxu0 %v87
    %118 = vmatprep.subr.mxu0 0.0
    %119 = vmatpush1.msra.mxu0 %v88
    %120 = vmatprep.subr.mxu0 0.0
    %121 = vmatpush1.msra.mxu0 %v89
    %122 = vmatprep.subr.mxu0 0.0
    %123 = vmatpush1.msra.mxu0 %v90
    %124 = vmatprep.subr.mxu0 0.0
    %125 = vmatpush1.msra.mxu0 %v91
    %126 = vmatprep.subr.mxu0 0.0
    %127 = vmatpush1.msra.mxu0 %v92
    %128 = vmatprep.subr.mxu0 0.0
    %129 = vmatpush1.msra.mxu0 %v93
    %130 = vmatprep.subr.mxu0 0.0
    %131 = vmatpush1.msra.mxu0 %v94
    %132 = vmatprep.subr.mxu0 0.0
    %133 = vmatpush1.msra.mxu0 %v95
    %134 = vmatprep.subr.mxu0 0.0
    %135 = vmatpush1.msra.mxu0 %v96
    %136 = vmatprep.subr.mxu0 0.0
    %137 = vmatpush1.msra.mxu0 0.0
    %138 = vmatprep.subr.mxu0 0.0
    %139 = vmatpush1.msra.mxu0 0.0
    %140 = vmatprep.subr.mxu0 0.0
    %141 = vmatpush1.msra.mxu0 0.0
    %142 = vmatprep.subr.mxu0 0.0
    %143 = vmatpush1.msra.mxu0 0.0
    %144 = vmatprep.subr.mxu0 0.0
    %145 = vmatpush1.msra.mxu0 0.0
    %146 = vmatprep.subr.mxu0 0.0
    %147 = vmatpush1.msra.mxu0 0.0
    %148 = vmatprep.subr.mxu0 0.0
    %149 = vmatpush1.msra.mxu0 0.0
    %150 = vmatprep.subr.mxu0 0.0
    %151 = vmatpush1.msra.mxu0 0.0
    %152 = vmatprep.subr.mxu0 0.0
    %153 = vmatpush1.msra.mxu0 0.0
    %154 = vmatprep.subr.mxu0 0.0
    %155 = vmatpush1.msra.mxu0 0.0
    %156 = vmatprep.subr.mxu0 0.0
    %157 = vmatpush1.msra.mxu0 0.0
    %158 = vmatprep.subr.mxu0 0.0
    %159 = vmatpush1.msra.mxu0 0.0
    %160 = vmatprep.subr.mxu0 0.0
    %161 = vmatpush1.msra.mxu0 0.0
    %162 = vmatprep.subr.mxu0 0.0
    %163 = vmatpush1.msra.mxu0 0.0
    %164 = vmatprep.subr.mxu0 0.0
    %165 = vmatpush1.msra.mxu0 0.0
    %166 = vmatprep.subr.mxu0 0.0
    %167 = vmatpush1.msra.mxu0 0.0
    %168 = vmatprep.mubr.f32.mxu0 0.0
    %169 = vmatmul.mubr.f32.gmra.mrb[0].mxu0 %v80
    %v170 = vpop.f32.mrb[0].mxu0
    %v171 = vadd.f32 %v102, %v170
    %v172 = vpop.f32.mrb[0].mxu0
    %173 = vdwg.mxu0
    %v174 = vmax.f32 %v171, 0.0
    %175 = vst [vmem:[#allocation2] sm:$0xff] %v174
    %v176 = vld [vmem:[#allocation2] sm:$0xff]
    %v177 = vld [vmem:[#allocation8] sm:$0xff]
    %v178 = vld [vmem:[#allocation8 + $0x8] sm:$0xff]
    %v179 = vld [vmem:[#allocation8 + $0x10] sm:$0xff]
    %v180 = vld [vmem:[#allocation8 + $0x18] sm:$0xff]
    %v181 = vld [vmem:[#allocation8 + $0x20] sm:$0xff]
    %v182 = vld [vmem:[#allocation8 + $0x28] sm:$0xff]
    %v183 = vld [vmem:[#allocation8 + $0x30] sm:$0xff]
    %v184 = vld [vmem:[#allocation8 + $0x38] sm:$0xff]
    %v185 = vld [vmem:[#allocation8 + $0x40] sm:$0xff]
    %v186 = vld [vmem:[#allocation8 + $0x48] sm:$0xff]
    %v187 = vld [vmem:[#allocation8 + $0x50] sm:$0xff]
    %v188 = vld [vmem:[#allocation8 + $0x58] sm:$0xff]
    %v189 = vld [vmem:[#allocation8 + $0x60] sm:$0xff]
    %v190 = vld [vmem:[#allocation8 + $0x68] sm:$0xff]
    %v191 = vld [vmem:[#allocation8 + $0x70] sm:$0xff]
    %v192 = vld [vmem:[#allocation8 + $0x78] sm:$0xff]
    %v193 = vld [vmem:[%s4] sm:$0x1]
    %v195 = vlaneseq
    %v196 = vshrl.u32 %v195, 7
    %v197 = vsub.s32 0, %v196
    %v198 = vrot.slane %v193, %v197
    %200 = vmatprep.subr.mxu0 0.0
    %201 = vmatpush1.msra.mxu0 %v177
    %202 = vmatprep.subr.mxu0 0.0
    %203 = vmatpush1.msra.mxu0 %v178
    %204 = vmatprep.subr.mxu0 0.0
    %205 = vmatpush1.msra.mxu0 %v179
    %206 = vmatprep.subr.mxu0 0.0
    %207 = vmatpush1.msra.mxu0 %v180
    %208 = vmatprep.subr.mxu0 0.0
    %209 = vmatpush1.msra.mxu0 %v181
    %210 = vmatprep.subr.mxu0 0.0
    %211 = vmatpush1.msra.mxu0 %v182
    %212 = vmatprep.subr.mxu0 0.0
    %213 = vmatpush1.msra.mxu0 %v183
    %214 = vmatprep.subr.mxu0 0.0
    %215 = vmatpush1.msra.mxu0 %v184
    %216 = vmatprep.subr.mxu0 0.0
    %217 = vmatpush1.msra.mxu0 %v185
    %218 = vmatprep.subr.mxu0 0.0
    %219 = vmatpush1.msra.mxu0 %v186
    %220 = vmatprep.subr.mxu0 0.0
    %221 = vmatpush1.msra.mxu0 %v187
    %222 = vmatprep.subr.mxu0 0.0
    %223 = vmatpush1.msra.mxu0 %v188
    %224 = vmatprep.subr.mxu0 0.0
    %225 = vmatpush1.msra.mxu0 %v189
    %226 = vmatprep.subr.mxu0 0.0
    %227 = vmatpush1.msra.mxu0 %v190
    %228 = vmatprep.subr.mxu0 0.0
    %229 = vmatpush1.msra.mxu0 %v191
    %230 = vmatprep.subr.mxu0 0.0
    %231 = vmatpush1.msra.mxu0 %v192
    %232 = vmatprep.subr.mxu0 0.0
    %233 = vmatpush1.msra.mxu0 0.0
    %234 = vmatprep.subr.mxu0 0.0
    %235 = vmatpush1.msra.mxu0 0.0
    %236 = vmatprep.subr.mxu0 0.0
    %237 = vmatpush1.msra.mxu0 0.0
    %238 = vmatprep.subr.mxu0 0.0
    %239 = vmatpush1.msra.mxu0 0.0
    %240 = vmatprep.subr.mxu0 0.0
    %241 = vmatpush1.msra.mxu0 0.0
    %242 = vmatprep.subr.mxu0 0.0
    %243 = vmatpush1.msra.mxu0 0.0
    %244 = vmatprep.subr.mxu0 0.0
    %245 = vmatpush1.msra.mxu0 0.0
    %246 = vmatprep.subr.mxu0 0.0
    %247 = vmatpush1.msra.mxu0 0.0
    %248 = vmatprep.subr.mxu0 0.0
    %249 = vmatpush1.msra.mxu0 0.0
    %250 = vmatprep.subr.mxu0 0.0
    %251 = vmatpush1.msra.mxu0 0.0
    %252 = vmatprep.subr.mxu0 0.0
    %253 = vmatpush1.msra.mxu0 0.0
    %254 = vmatprep.subr.mxu0 0.0
    %255 = vmatpush1.msra.mxu0 0.0
    %256 = vmatprep.subr.mxu0 0.0
    %257 = vmatpush1.msra.mxu0 0.0
    %258 = vmatprep.subr.mxu0 0.0
    %259 = vmatpush1.msra.mxu0 0.0
    %260 = vmatprep.subr.mxu0 0.0
    %261 = vmatpush1.msra.mxu0 0.0
    %262 = vmatprep.subr.mxu0 0.0
    %263 = vmatpush1.msra.mxu0 0.0
    %264 = vmatprep.mubr.f32.mxu0 0.0
    %265 = vmatmul.mubr.f32.gmra.mrb[0].mxu0 %v176
    %v266 = vpop.f32.mrb[0].mxu0
    %v267 = vadd.f32 %v198, %v266
    %v268 = vpop.f32.mrb[0].mxu0
    %269 = vdwg.mxu0
    %v270 = vmax.f32 %v267, 0.0
    %271 = vst [vmem:[#allocation2] sm:$0xff] %v270
    %v272 = vld [vmem:[#allocation2] sm:$0xff]
    %v273 = vld [vmem:[#allocation9] sm:$0xff]
    %v274 = vld [vmem:[#allocation9 + $0x8] sm:$0xff]
    %v275 = vld [vmem:[#allocation9 + $0x10] sm:$0xff]
    %v276 = vld [vmem:[#allocation9 + $0x18] sm:$0xff]
    %v277 = vld [vmem:[#allocation9 + $0x20] sm:$0xff]
    %v278 = vld [vmem:[#allocation9 + $0x28] sm:$0xff]
    %v279 = vld [vmem:[#allocation9 + $0x30] sm:$0xff]
    %v280 = vld [vmem:[#allocation9 + $0x38] sm:$0xff]
    %v281 = vld [vmem:[#allocation9 + $0x40] sm:$0xff]
    %v282 = vld [vmem:[#allocation9 + $0x48] sm:$0xff]
    %v283 = vld [vmem:[#allocation9 + $0x50] sm:$0xff]
    %v284 = vld [vmem:[#allocation9 + $0x58] sm:$0xff]
    %v285 = vld [vmem:[#allocation9 + $0x60] sm:$0xff]
    %v286 = vld [vmem:[#allocation9 + $0x68] sm:$0xff]
    %v287 = vld [vmem:[#allocation9 + $0x70] sm:$0xff]
    %v288 = vld [vmem:[#allocation9 + $0x78] sm:$0xff]
    %v289 = vld [vmem:[%s6] sm:$0x1]
    %v291 = vlaneseq
    %v292 = vshrl.u32 %v291, 7
    %v293 = vsub.s32 0, %v292
    %v294 = vrot.slane %v289, %v293
    %296 = vmatprep.subr.mxu0 0.0
    %297 = vmatpush1.msra.mxu0 %v273
    %298 = vmatprep.subr.mxu0 0.0
    %299 = vmatpush1.msra.mxu0 %v274
    %300 = vmatprep.subr.mxu0 0.0
    %301 = vmatpush1.msra.mxu0 %v275
    %302 = vmatprep.subr.mxu0 0.0
    %303 = vmatpush1.msra.mxu0 %v276
    %304 = vmatprep.subr.mxu0 0.0
    %305 = vmatpush1.msra.mxu0 %v277
    %306 = vmatprep.subr.mxu0 0.0
    %307 = vmatpush1.msra.mxu0 %v278
    %308 = vmatprep.subr.mxu0 0.0
    %309 = vmatpush1.msra.mxu0 %v279
    %310 = vmatprep.subr.mxu0 0.0
    %311 = vmatpush1.msra.mxu0 %v280
    %312 = vmatprep.subr.mxu0 0.0
    %313 = vmatpush1.msra.mxu0 %v281
    %314 = vmatprep.subr.mxu0 0.0
    %315 = vmatpush1.msra.mxu0 %v282
    %316 = vmatprep.subr.mxu0 0.0
    %317 = vmatpush1.msra.mxu0 %v283
    %318 = vmatprep.subr.mxu0 0.0
    %319 = vmatpush1.msra.mxu0 %v284
    %320 = vmatprep.subr.mxu0 0.0
    %321 = vmatpush1.msra.mxu0 %v285
    %322 = vmatprep.subr.mxu0 0.0
    %323 = vmatpush1.msra.mxu0 %v286
    %324 = vmatprep.subr.mxu0 0.0
    %325 = vmatpush1.msra.mxu0 %v287
    %326 = vmatprep.subr.mxu0 0.0
    %327 = vmatpush1.msra.mxu0 %v288
    %328 = vmatprep.subr.mxu0 0.0
    %329 = vmatpush1.msra.mxu0 0.0
    %330 = vmatprep.subr.mxu0 0.0
    %331 = vmatpush1.msra.mxu0 0.0
    %332 = vmatprep.subr.mxu0 0.0
    %333 = vmatpush1.msra.mxu0 0.0
    %334 = vmatprep.subr.mxu0 0.0
    %335 = vmatpush1.msra.mxu0 0.0
    %336 = vmatprep.subr.mxu0 0.0
    %337 = vmatpush1.msra.mxu0 0.0
    %338 = vmatprep.subr.mxu0 0.0
    %339 = vmatpush1.msra.mxu0 0.0
    %340 = vmatprep.subr.mxu0 0.0
    %341 = vmatpush1.msra.mxu0 0.0
    %342 = vmatprep.subr.mxu0 0.0
    %343 = vmatpush1.msra.mxu0 0.0
    %344 = vmatprep.subr.mxu0 0.0
    %345 = vmatpush1.msra.mxu0 0.0
    %346 = vmatprep.subr.mxu0 0.0
    %347 = vmatpush1.msra.mxu0 0.0
    %348 = vmatprep.subr.mxu0 0.0
    %349 = vmatpush1.msra.mxu0 0.0
    %350 = vmatprep.subr.mxu0 0.0
    %351 = vmatpush1.msra.mxu0 0.0
    %352 = vmatprep.subr.mxu0 0.0
    %353 = vmatpush1.msra.mxu0 0.0
    %354 = vmatprep.subr.mxu0 0.0
    %355 = vmatpush1.msra.mxu0 0.0
    %356 = vmatprep.subr.mxu0 0.0
    %357 = vmatpush1.msra.mxu0 0.0
    %358 = vmatprep.subr.mxu0 0.0
    %359 = vmatpush1.msra.mxu0 0.0
    %360 = vmatprep.mubr.f32.mxu0 0.0
    %361 = vmatmul.mubr.f32.gmra.mrb[0].mxu0 %v272
    %v362 = vpop.f32.mrb[0].mxu0
    %v363 = vadd.f32 %v294, %v362
    %v364 = vpop.f32.mrb[0].mxu0
    %365 = vdwg.mxu0
    %366 = vst [vmem:[#allocation11] sm:$0xff] %v363
    // Predicated region
    $region46: #{tpu_custom_call.1} parent=1 // pred_check
      _
    $region47: #{tpu_custom_call.1} parent=1 // pred_check_branch
      %368 = sbr.rel (0) target = $region49
    $region48: #{tpu_custom_call.1} parent=1 // pred_region
      %s370 = ssub.s32 128, 128
      %371 = vsyncadd [#allocation5], %s370
      %s373 = sshll.u32 [#allocation11], 4
      %s374 = int_to_ptr.vmem [resolvable:$true] %s373
      %376 = dma.vmem_to_hbm [thread:$0]  %s374, 128, %s7, [#allocation5]
    $region49: #{tpu_custom_call.1} parent=1 // pred_fallthru
      _
    // Predicated region
    $region50: #{tpu_custom_call.1} parent=1 // pred_check
      _
    $region51: #{tpu_custom_call.1} parent=1 // pred_check_branch
      %378 = sbr.rel (0) target = $region53
    $region52: #{tpu_custom_call.1} parent=1 // pred_region
      %379 = dma.done [#allocation5], 128
    $region53: #{tpu_custom_call.1} parent=1 // pred_fallthru
      _
    %380 = vsyncpa [#allocation4], 1
    %381 = vsyncpa [#allocation7], 1
    %382 = vsyncpa [#allocation10], 1
    %383 = vsyncpa [#allocation5], 1

</llo_original>
